<compile_context>
chip_gen: v6e
topology: v6e:2x2x1
jax: 0.10.0
libtpu: 0.0.40
codegen_flags: <defaults>
</compile_context>

<pallas_src>
import jax
import jax.numpy as jnp
from jax.experimental import pallas as pl
from jax.experimental.pallas import tpu as pltpu


def time_embedding_kernel(t_ref, pos_hbm, w1_ref, b1_ref, w2_ref, b2_ref,
                          out_ref, x_scratch, sem):
    """t_ref: SMEM (B,) int32; pos_hbm: raw HBM ref; w/b/out refs: VMEM tiles."""
    i = pl.program_id(0)
    tb = out_ref.shape[0]                      # rows handled by this grid step (static)

    # Gather: issue one row DMA per batch element (HBM -> VMEM), then wait on all.
    # The DMA engine does the index_select; nothing touches the vector load slots.
    copies = []
    for r in range(tb):                        # tb is static -> fully unrolled
        idx = t_ref[i * tb + r]                # scalar read from SMEM
        cp = pltpu.make_async_copy(
            pos_hbm.at[pl.ds(idx, 1), :],      # (1, P) row in HBM
            x_scratch.at[pl.ds(r, 1), :],      # (1, P) row in VMEM scratch
            sem.at[r])
        cp.start()
        copies.append(cp)
    for cp in copies:
        cp.wait()

    # 2-layer MLP with SiLU, MXU matmuls with f32 accumulation.
    x = x_scratch[...]                                                   # (tb, P)
    h = jnp.dot(x, w1_ref[...], preferred_element_type=jnp.float32)      # (tb, T)
    h = h + b1_ref[...]
    h = h * jax.nn.sigmoid(h)                                            # SiLU (EUP)
    y = jnp.dot(h, w2_ref[...], preferred_element_type=jnp.float32)      # (tb, T)
    y = y + b2_ref[...]
    out_ref[...] = y.astype(out_ref.dtype)


def _pick_block_b(B, requested):
    if requested is not None:
        assert B % requested == 0, "batch must be divisible by block_b"
        return requested
    if B <= 128:
        return B
    # largest divisor of B that is <= 128 (keeps per-step DMA unroll bounded)
    for cand in range(128, 0, -1):
        if B % cand == 0:
            return cand
    return B


def time_embedding(t, pos_embedding, w1, b1, w2, b2, *, block_b=None):
    B = t.shape[0]
    max_len, P = pos_embedding.shape
    T = w1.shape[1]
    b1_2d = b1.reshape(1, T)
    b2_2d = b2.reshape(1, T)

    # Clamp indices: no runtime OOB checks on HBM-row DMAs; torch would raise instead.
    t = jnp.clip(t.astype(jnp.int32), 0, max_len - 1)

    block_b = _pick_block_b(B, block_b)
    grid = (B // block_b,)

    cost = pl.CostEstimate(
        flops=2 * B * P * T + 2 * B * T * T,
        transcendentals=B * T,                                   # sigmoid
        bytes_accessed=4 * (B * P + P * T + T + T * T + T + B * T),
    )

    return pl.pallas_call(
        time_embedding_kernel,
        out_shape=jax.ShapeDtypeStruct((B, T), jnp.float32),
        grid_spec=pltpu.PrefetchScalarGridSpec(
            num_scalar_prefetch=1,                # t -> SMEM; passed first to kernel & index_maps
            grid=grid,
            in_specs=[
                pl.BlockSpec(memory_space=pl.ANY),               # pos table stays in HBM
                pl.BlockSpec((P, T), lambda i, t: (0, 0)),       # W1 resident across grid
                pl.BlockSpec((1, T), lambda i, t: (0, 0)),       # b1
                pl.BlockSpec((T, T), lambda i, t: (0, 0)),       # W2
                pl.BlockSpec((1, T), lambda i, t: (0, 0)),       # b2
            ],
            out_specs=pl.BlockSpec((block_b, T), lambda i, t: (i, 0)),
            scratch_shapes=[
                pltpu.VMEM((block_b, P), jnp.float32),           # gathered rows
                pltpu.SemaphoreType.DMA((block_b,)),             # one sem per row DMA
            ],
        ),
        compiler_params=pltpu.CompilerParams(dimension_semantics=("parallel",)),
        cost_estimate=cost,
    )(t, pos_embedding, w1, b1_2d, w2, b2_2d)
    # TODO(synk): for production, fuse this µs-scale op into its consumer rather than
    # paying standalone dispatch overhead per call.


def make_pos_embedding(max_len, pos_emb_dim):
    """Matches the PyTorch buffer construction exactly."""
    assert pos_emb_dim % 2 == 0, "Embedding dim must be a multiple of 2!"
    pos = jnp.arange(0, max_len, dtype=jnp.float32)[:, None]            # (max_len, 1)
    _2i = jnp.arange(0, pos_emb_dim, 2, dtype=jnp.float32)              # (P/2,)
    angles = pos / (10000.0 ** (_2i / pos_emb_dim))                     # (max_len, P/2)
    pe = jnp.zeros((max_len, pos_emb_dim), dtype=jnp.float32)
    pe = pe.at[:, 0::2].set(jnp.sin(angles))
    pe = pe.at[:, 1::2].set(jnp.cos(angles))
    return pe


if __name__ == "__main__":
    # Small, forward-consistent shapes. T=128 keeps the output store lane-dense.
    B = 8
    pos_emb_dim = 32     # P (must be even)
    time_emb_dim = 128   # T
    max_len = 5000

    key = jax.random.PRNGKey(0)
    k_t, k_w1, k_b1, k_w2, k_b2 = jax.random.split(key, 5)

    # Synthetic parameters (torch Linear weight is (out, in) -> store (in, out)).
    w1 = jax.random.normal(k_w1, (pos_emb_dim, time_emb_dim), jnp.float32) * 0.1
    b1 = jax.random.normal(k_b1, (time_emb_dim,), jnp.float32) * 0.1
    w2 = jax.random.normal(k_w2, (time_emb_dim, time_emb_dim), jnp.float32) * 0.1
    b2 = jax.random.normal(k_b2, (time_emb_dim,), jnp.float32) * 0.1

    pos_embedding = make_pos_embedding(max_len, pos_emb_dim)

    # Timestep indices (like the integer tensor `t` in the torch forward).
    t = jax.random.randint(k_t, (B,), 0, max_len, dtype=jnp.int32)

    out = time_embedding(t, pos_embedding, w1, b1, w2, b2)
    out = jax.block_until_ready(out)

    # Pure-JAX reference for correctness.
    x_ref = pos_embedding[t]                                  # index_select
    h_ref = x_ref @ w1 + b1
    h_ref = h_ref * jax.nn.sigmoid(h_ref)                     # SiLU
    ref = h_ref @ w2 + b2

    assert out.shape == (B, time_emb_dim)
    assert jnp.allclose(out, ref, atol=1e-5, rtol=1e-5), "mismatch vs reference"
    print("KERNEL_OK")
</pallas_src>

<mosaic_0001>
module attributes {stable_mosaic.version = 11 : i64} {
  func.func @time_embedding_kernel(%arg0: i32, %arg1: memref<8xi32, #tpu.memory_space<smem>>, %arg2: memref<5000x32xf32, #tpu.memory_space<any>>, %arg3: memref<32x128xf32, #tpu.memory_space<vmem>>, %arg4: memref<1x128xf32, #tpu.memory_space<vmem>>, %arg5: memref<128x128xf32, #tpu.memory_space<vmem>>, %arg6: memref<1x128xf32, #tpu.memory_space<vmem>>, %arg7: memref<8x128xf32, #tpu.memory_space<vmem>>, %arg8: memref<8x32xf32, #tpu.memory_space<vmem>>, %arg9: memref<8x!tpu.dma_semaphore, #tpu.memory_space<semaphore_mem>>) attributes {dimension_semantics = [#tpu.dimension_semantics<parallel>], iteration_bounds = array<i64: 1>, scalar_prefetch = 1 : i64, scratch_operands = 2 : i64, tpu.core_type = #tpu.core_type<tc>, window_params = [{}, {pipeline_mode = #tpu.pipeline_mode<synchronous>, transform_indices = @transform_1, window_bounds = array<i64: 32, 128>}, {pipeline_mode = #tpu.pipeline_mode<synchronous>, transform_indices = @transform_2, window_bounds = array<i64: 1, 128>}, {pipeline_mode = #tpu.pipeline_mode<synchronous>, transform_indices = @transform_3, window_bounds = array<i64: 128, 128>}, {pipeline_mode = #tpu.pipeline_mode<synchronous>, transform_indices = @transform_4, window_bounds = array<i64: 1, 128>}, {transform_indices = @transform_5, window_bounds = array<i64: 8, 128>}]} {
    %c8_i32 = arith.constant 8 : i32
    %0 = arith.muli %arg0, %c8_i32 : i32
    %c0_i32 = arith.constant 0 : i32
    %1 = arith.addi %0, %c0_i32 : i32
    %2 = arith.index_cast %1 : i32 to index
    %3 = memref.load %arg1[%2] : memref<8xi32, #tpu.memory_space<smem>>
    %c0_i32_0 = arith.constant 0 : i32
    %c0_i32_1 = arith.constant 0 : i32
    %4 = tpu.memref_slice %arg2[%3, %c0_i32_1] : memref<5000x32xf32, #tpu.memory_space<any>> -> memref<1x32xf32, #tpu.memory_space<any>>
    %c0_i32_2 = arith.constant 0 : i32
    %c0_i32_3 = arith.constant 0 : i32
    %5 = tpu.memref_slice %arg8[%c0_i32_2, %c0_i32_3] : memref<8x32xf32, #tpu.memory_space<vmem>> -> memref<1x32xf32, #tpu.memory_space<vmem>>
    %6 = tpu.memref_slice %arg9[%c0_i32_0] : memref<8x!tpu.dma_semaphore, #tpu.memory_space<semaphore_mem>> -> memref<1x!tpu.dma_semaphore, #tpu.memory_space<semaphore_mem>>
    %7 = tpu.memref_squeeze %6 : memref<1x!tpu.dma_semaphore, #tpu.memory_space<semaphore_mem>> -> memref<!tpu.dma_semaphore, #tpu.memory_space<semaphore_mem>>
    tpu.enqueue_dma source(%4 : memref<1x32xf32, #tpu.memory_space<any>>) target(%5 : memref<1x32xf32, #tpu.memory_space<vmem>>) target_semaphore(%7 : memref<!tpu.dma_semaphore, #tpu.memory_space<semaphore_mem>>)
    %c8_i32_4 = arith.constant 8 : i32
    %8 = arith.muli %arg0, %c8_i32_4 : i32
    %c1_i32 = arith.constant 1 : i32
    %9 = arith.addi %8, %c1_i32 : i32
    %10 = arith.index_cast %9 : i32 to index
    %11 = memref.load %arg1[%10] : memref<8xi32, #tpu.memory_space<smem>>
    %c1_i32_5 = arith.constant 1 : i32
    %c0_i32_6 = arith.constant 0 : i32
    %12 = tpu.memref_slice %arg2[%11, %c0_i32_6] : memref<5000x32xf32, #tpu.memory_space<any>> -> memref<1x32xf32, #tpu.memory_space<any>>
    %c1_i32_7 = arith.constant 1 : i32
    %c0_i32_8 = arith.constant 0 : i32
    %13 = tpu.memref_slice %arg8[%c1_i32_7, %c0_i32_8] : memref<8x32xf32, #tpu.memory_space<vmem>> -> memref<1x32xf32, #tpu.memory_space<vmem>>
    %14 = tpu.memref_slice %arg9[%c1_i32_5] : memref<8x!tpu.dma_semaphore, #tpu.memory_space<semaphore_mem>> -> memref<1x!tpu.dma_semaphore, #tpu.memory_space<semaphore_mem>>
    %15 = tpu.memref_squeeze %14 : memref<1x!tpu.dma_semaphore, #tpu.memory_space<semaphore_mem>> -> memref<!tpu.dma_semaphore, #tpu.memory_space<semaphore_mem>>
    tpu.enqueue_dma source(%12 : memref<1x32xf32, #tpu.memory_space<any>>) target(%13 : memref<1x32xf32, #tpu.memory_space<vmem>>) target_semaphore(%15 : memref<!tpu.dma_semaphore, #tpu.memory_space<semaphore_mem>>)
    %c8_i32_9 = arith.constant 8 : i32
    %16 = arith.muli %arg0, %c8_i32_9 : i32
    %c2_i32 = arith.constant 2 : i32
    %17 = arith.addi %16, %c2_i32 : i32
    %18 = arith.index_cast %17 : i32 to index
    %19 = memref.load %arg1[%18] : memref<8xi32, #tpu.memory_space<smem>>
    %c2_i32_10 = arith.constant 2 : i32
    %c0_i32_11 = arith.constant 0 : i32
    %20 = tpu.memref_slice %arg2[%19, %c0_i32_11] : memref<5000x32xf32, #tpu.memory_space<any>> -> memref<1x32xf32, #tpu.memory_space<any>>
    %c2_i32_12 = arith.constant 2 : i32
    %c0_i32_13 = arith.constant 0 : i32
    %21 = tpu.memref_slice %arg8[%c2_i32_12, %c0_i32_13] : memref<8x32xf32, #tpu.memory_space<vmem>> -> memref<1x32xf32, #tpu.memory_space<vmem>>
    %22 = tpu.memref_slice %arg9[%c2_i32_10] : memref<8x!tpu.dma_semaphore, #tpu.memory_space<semaphore_mem>> -> memref<1x!tpu.dma_semaphore, #tpu.memory_space<semaphore_mem>>
    %23 = tpu.memref_squeeze %22 : memref<1x!tpu.dma_semaphore, #tpu.memory_space<semaphore_mem>> -> memref<!tpu.dma_semaphore, #tpu.memory_space<semaphore_mem>>
    tpu.enqueue_dma source(%20 : memref<1x32xf32, #tpu.memory_space<any>>) target(%21 : memref<1x32xf32, #tpu.memory_space<vmem>>) target_semaphore(%23 : memref<!tpu.dma_semaphore, #tpu.memory_space<semaphore_mem>>)
    %c8_i32_14 = arith.constant 8 : i32
    %24 = arith.muli %arg0, %c8_i32_14 : i32
    %c3_i32 = arith.constant 3 : i32
    %25 = arith.addi %24, %c3_i32 : i32
    %26 = arith.index_cast %25 : i32 to index
    %27 = memref.load %arg1[%26] : memref<8xi32, #tpu.memory_space<smem>>
    %c3_i32_15 = arith.constant 3 : i32
    %c0_i32_16 = arith.constant 0 : i32
    %28 = tpu.memref_slice %arg2[%27, %c0_i32_16] : memref<5000x32xf32, #tpu.memory_space<any>> -> memref<1x32xf32, #tpu.memory_space<any>>
    %c3_i32_17 = arith.constant 3 : i32
    %c0_i32_18 = arith.constant 0 : i32
    %29 = tpu.memref_slice %arg8[%c3_i32_17, %c0_i32_18] : memref<8x32xf32, #tpu.memory_space<vmem>> -> memref<1x32xf32, #tpu.memory_space<vmem>>
    %30 = tpu.memref_slice %arg9[%c3_i32_15] : memref<8x!tpu.dma_semaphore, #tpu.memory_space<semaphore_mem>> -> memref<1x!tpu.dma_semaphore, #tpu.memory_space<semaphore_mem>>
    %31 = tpu.memref_squeeze %30 : memref<1x!tpu.dma_semaphore, #tpu.memory_space<semaphore_mem>> -> memref<!tpu.dma_semaphore, #tpu.memory_space<semaphore_mem>>
    tpu.enqueue_dma source(%28 : memref<1x32xf32, #tpu.memory_space<any>>) target(%29 : memref<1x32xf32, #tpu.memory_space<vmem>>) target_semaphore(%31 : memref<!tpu.dma_semaphore, #tpu.memory_space<semaphore_mem>>)
    %c8_i32_19 = arith.constant 8 : i32
    %32 = arith.muli %arg0, %c8_i32_19 : i32
    %c4_i32 = arith.constant 4 : i32
    %33 = arith.addi %32, %c4_i32 : i32
    %34 = arith.index_cast %33 : i32 to index
    %35 = memref.load %arg1[%34] : memref<8xi32, #tpu.memory_space<smem>>
    %c4_i32_20 = arith.constant 4 : i32
    %c0_i32_21 = arith.constant 0 : i32
    %36 = tpu.memref_slice %arg2[%35, %c0_i32_21] : memref<5000x32xf32, #tpu.memory_space<any>> -> memref<1x32xf32, #tpu.memory_space<any>>
    %c4_i32_22 = arith.constant 4 : i32
    %c0_i32_23 = arith.constant 0 : i32
    %37 = tpu.memref_slice %arg8[%c4_i32_22, %c0_i32_23] : memref<8x32xf32, #tpu.memory_space<vmem>> -> memref<1x32xf32, #tpu.memory_space<vmem>>
    %38 = tpu.memref_slice %arg9[%c4_i32_20] : memref<8x!tpu.dma_semaphore, #tpu.memory_space<semaphore_mem>> -> memref<1x!tpu.dma_semaphore, #tpu.memory_space<semaphore_mem>>
    %39 = tpu.memref_squeeze %38 : memref<1x!tpu.dma_semaphore, #tpu.memory_space<semaphore_mem>> -> memref<!tpu.dma_semaphore, #tpu.memory_space<semaphore_mem>>
    tpu.enqueue_dma source(%36 : memref<1x32xf32, #tpu.memory_space<any>>) target(%37 : memref<1x32xf32, #tpu.memory_space<vmem>>) target_semaphore(%39 : memref<!tpu.dma_semaphore, #tpu.memory_space<semaphore_mem>>)
    %c8_i32_24 = arith.constant 8 : i32
    %40 = arith.muli %arg0, %c8_i32_24 : i32
    %c5_i32 = arith.constant 5 : i32
    %41 = arith.addi %40, %c5_i32 : i32
    %42 = arith.index_cast %41 : i32 to index
    %43 = memref.load %arg1[%42] : memref<8xi32, #tpu.memory_space<smem>>
    %c5_i32_25 = arith.constant 5 : i32
    %c0_i32_26 = arith.constant 0 : i32
    %44 = tpu.memref_slice %arg2[%43, %c0_i32_26] : memref<5000x32xf32, #tpu.memory_space<any>> -> memref<1x32xf32, #tpu.memory_space<any>>
    %c5_i32_27 = arith.constant 5 : i32
    %c0_i32_28 = arith.constant 0 : i32
    %45 = tpu.memref_slice %arg8[%c5_i32_27, %c0_i32_28] : memref<8x32xf32, #tpu.memory_space<vmem>> -> memref<1x32xf32, #tpu.memory_space<vmem>>
    %46 = tpu.memref_slice %arg9[%c5_i32_25] : memref<8x!tpu.dma_semaphore, #tpu.memory_space<semaphore_mem>> -> memref<1x!tpu.dma_semaphore, #tpu.memory_space<semaphore_mem>>
    %47 = tpu.memref_squeeze %46 : memref<1x!tpu.dma_semaphore, #tpu.memory_space<semaphore_mem>> -> memref<!tpu.dma_semaphore, #tpu.memory_space<semaphore_mem>>
    tpu.enqueue_dma source(%44 : memref<1x32xf32, #tpu.memory_space<any>>) target(%45 : memref<1x32xf32, #tpu.memory_space<vmem>>) target_semaphore(%47 : memref<!tpu.dma_semaphore, #tpu.memory_space<semaphore_mem>>)
    %c8_i32_29 = arith.constant 8 : i32
    %48 = arith.muli %arg0, %c8_i32_29 : i32
    %c6_i32 = arith.constant 6 : i32
    %49 = arith.addi %48, %c6_i32 : i32
    %50 = arith.index_cast %49 : i32 to index
    %51 = memref.load %arg1[%50] : memref<8xi32, #tpu.memory_space<smem>>
    %c6_i32_30 = arith.constant 6 : i32
    %c0_i32_31 = arith.constant 0 : i32
    %52 = tpu.memref_slice %arg2[%51, %c0_i32_31] : memref<5000x32xf32, #tpu.memory_space<any>> -> memref<1x32xf32, #tpu.memory_space<any>>
    %c6_i32_32 = arith.constant 6 : i32
    %c0_i32_33 = arith.constant 0 : i32
    %53 = tpu.memref_slice %arg8[%c6_i32_32, %c0_i32_33] : memref<8x32xf32, #tpu.memory_space<vmem>> -> memref<1x32xf32, #tpu.memory_space<vmem>>
    %54 = tpu.memref_slice %arg9[%c6_i32_30] : memref<8x!tpu.dma_semaphore, #tpu.memory_space<semaphore_mem>> -> memref<1x!tpu.dma_semaphore, #tpu.memory_space<semaphore_mem>>
    %55 = tpu.memref_squeeze %54 : memref<1x!tpu.dma_semaphore, #tpu.memory_space<semaphore_mem>> -> memref<!tpu.dma_semaphore, #tpu.memory_space<semaphore_mem>>
    tpu.enqueue_dma source(%52 : memref<1x32xf32, #tpu.memory_space<any>>) target(%53 : memref<1x32xf32, #tpu.memory_space<vmem>>) target_semaphore(%55 : memref<!tpu.dma_semaphore, #tpu.memory_space<semaphore_mem>>)
    %c8_i32_34 = arith.constant 8 : i32
    %56 = arith.muli %arg0, %c8_i32_34 : i32
    %c7_i32 = arith.constant 7 : i32
    %57 = arith.addi %56, %c7_i32 : i32
    %58 = arith.index_cast %57 : i32 to index
    %59 = memref.load %arg1[%58] : memref<8xi32, #tpu.memory_space<smem>>
    %c7_i32_35 = arith.constant 7 : i32
    %c0_i32_36 = arith.constant 0 : i32
    %60 = tpu.memref_slice %arg2[%59, %c0_i32_36] : memref<5000x32xf32, #tpu.memory_space<any>> -> memref<1x32xf32, #tpu.memory_space<any>>
    %c7_i32_37 = arith.constant 7 : i32
    %c0_i32_38 = arith.constant 0 : i32
    %61 = tpu.memref_slice %arg8[%c7_i32_37, %c0_i32_38] : memref<8x32xf32, #tpu.memory_space<vmem>> -> memref<1x32xf32, #tpu.memory_space<vmem>>
    %62 = tpu.memref_slice %arg9[%c7_i32_35] : memref<8x!tpu.dma_semaphore, #tpu.memory_space<semaphore_mem>> -> memref<1x!tpu.dma_semaphore, #tpu.memory_space<semaphore_mem>>
    %63 = tpu.memref_squeeze %62 : memref<1x!tpu.dma_semaphore, #tpu.memory_space<semaphore_mem>> -> memref<!tpu.dma_semaphore, #tpu.memory_space<semaphore_mem>>
    tpu.enqueue_dma source(%60 : memref<1x32xf32, #tpu.memory_space<any>>) target(%61 : memref<1x32xf32, #tpu.memory_space<vmem>>) target_semaphore(%63 : memref<!tpu.dma_semaphore, #tpu.memory_space<semaphore_mem>>)
    %c0_i32_39 = arith.constant 0 : i32
    %c0_i32_40 = arith.constant 0 : i32
    %64 = tpu.memref_slice %arg2[%3, %c0_i32_40] : memref<5000x32xf32, #tpu.memory_space<any>> -> memref<1x32xf32, #tpu.memory_space<any>>
    %c0_i32_41 = arith.constant 0 : i32
    %c0_i32_42 = arith.constant 0 : i32
    %65 = tpu.memref_slice %arg8[%c0_i32_41, %c0_i32_42] : memref<8x32xf32, #tpu.memory_space<vmem>> -> memref<1x32xf32, #tpu.memory_space<vmem>>
    %66 = tpu.memref_slice %arg9[%c0_i32_39] : memref<8x!tpu.dma_semaphore, #tpu.memory_space<semaphore_mem>> -> memref<1x!tpu.dma_semaphore, #tpu.memory_space<semaphore_mem>>
    %67 = tpu.memref_squeeze %66 : memref<1x!tpu.dma_semaphore, #tpu.memory_space<semaphore_mem>> -> memref<!tpu.dma_semaphore, #tpu.memory_space<semaphore_mem>>
    tpu.wait_dma2 semaphore(%67 : memref<!tpu.dma_semaphore, #tpu.memory_space<semaphore_mem>>) src(%64 : memref<1x32xf32, #tpu.memory_space<any>>) dst(%65 : memref<1x32xf32, #tpu.memory_space<vmem>>)
    %c1_i32_43 = arith.constant 1 : i32
    %c0_i32_44 = arith.constant 0 : i32
    %68 = tpu.memref_slice %arg2[%11, %c0_i32_44] : memref<5000x32xf32, #tpu.memory_space<any>> -> memref<1x32xf32, #tpu.memory_space<any>>
    %c1_i32_45 = arith.constant 1 : i32
    %c0_i32_46 = arith.constant 0 : i32
    %69 = tpu.memref_slice %arg8[%c1_i32_45, %c0_i32_46] : memref<8x32xf32, #tpu.memory_space<vmem>> -> memref<1x32xf32, #tpu.memory_space<vmem>>
    %70 = tpu.memref_slice %arg9[%c1_i32_43] : memref<8x!tpu.dma_semaphore, #tpu.memory_space<semaphore_mem>> -> memref<1x!tpu.dma_semaphore, #tpu.memory_space<semaphore_mem>>
    %71 = tpu.memref_squeeze %70 : memref<1x!tpu.dma_semaphore, #tpu.memory_space<semaphore_mem>> -> memref<!tpu.dma_semaphore, #tpu.memory_space<semaphore_mem>>
    tpu.wait_dma2 semaphore(%71 : memref<!tpu.dma_semaphore, #tpu.memory_space<semaphore_mem>>) src(%68 : memref<1x32xf32, #tpu.memory_space<any>>) dst(%69 : memref<1x32xf32, #tpu.memory_space<vmem>>)
    %c2_i32_47 = arith.constant 2 : i32
    %c0_i32_48 = arith.constant 0 : i32
    %72 = tpu.memref_slice %arg2[%19, %c0_i32_48] : memref<5000x32xf32, #tpu.memory_space<any>> -> memref<1x32xf32, #tpu.memory_space<any>>
    %c2_i32_49 = arith.constant 2 : i32
    %c0_i32_50 = arith.constant 0 : i32
    %73 = tpu.memref_slice %arg8[%c2_i32_49, %c0_i32_50] : memref<8x32xf32, #tpu.memory_space<vmem>> -> memref<1x32xf32, #tpu.memory_space<vmem>>
    %74 = tpu.memref_slice %arg9[%c2_i32_47] : memref<8x!tpu.dma_semaphore, #tpu.memory_space<semaphore_mem>> -> memref<1x!tpu.dma_semaphore, #tpu.memory_space<semaphore_mem>>
    %75 = tpu.memref_squeeze %74 : memref<1x!tpu.dma_semaphore, #tpu.memory_space<semaphore_mem>> -> memref<!tpu.dma_semaphore, #tpu.memory_space<semaphore_mem>>
    tpu.wait_dma2 semaphore(%75 : memref<!tpu.dma_semaphore, #tpu.memory_space<semaphore_mem>>) src(%72 : memref<1x32xf32, #tpu.memory_space<any>>) dst(%73 : memref<1x32xf32, #tpu.memory_space<vmem>>)
    %c3_i32_51 = arith.constant 3 : i32
    %c0_i32_52 = arith.constant 0 : i32
    %76 = tpu.memref_slice %arg2[%27, %c0_i32_52] : memref<5000x32xf32, #tpu.memory_space<any>> -> memref<1x32xf32, #tpu.memory_space<any>>
    %c3_i32_53 = arith.constant 3 : i32
    %c0_i32_54 = arith.constant 0 : i32
    %77 = tpu.memref_slice %arg8[%c3_i32_53, %c0_i32_54] : memref<8x32xf32, #tpu.memory_space<vmem>> -> memref<1x32xf32, #tpu.memory_space<vmem>>
    %78 = tpu.memref_slice %arg9[%c3_i32_51] : memref<8x!tpu.dma_semaphore, #tpu.memory_space<semaphore_mem>> -> memref<1x!tpu.dma_semaphore, #tpu.memory_space<semaphore_mem>>
    %79 = tpu.memref_squeeze %78 : memref<1x!tpu.dma_semaphore, #tpu.memory_space<semaphore_mem>> -> memref<!tpu.dma_semaphore, #tpu.memory_space<semaphore_mem>>
    tpu.wait_dma2 semaphore(%79 : memref<!tpu.dma_semaphore, #tpu.memory_space<semaphore_mem>>) src(%76 : memref<1x32xf32, #tpu.memory_space<any>>) dst(%77 : memref<1x32xf32, #tpu.memory_space<vmem>>)
    %c4_i32_55 = arith.constant 4 : i32
    %c0_i32_56 = arith.constant 0 : i32
    %80 = tpu.memref_slice %arg2[%35, %c0_i32_56] : memref<5000x32xf32, #tpu.memory_space<any>> -> memref<1x32xf32, #tpu.memory_space<any>>
    %c4_i32_57 = arith.constant 4 : i32
    %c0_i32_58 = arith.constant 0 : i32
    %81 = tpu.memref_slice %arg8[%c4_i32_57, %c0_i32_58] : memref<8x32xf32, #tpu.memory_space<vmem>> -> memref<1x32xf32, #tpu.memory_space<vmem>>
    %82 = tpu.memref_slice %arg9[%c4_i32_55] : memref<8x!tpu.dma_semaphore, #tpu.memory_space<semaphore_mem>> -> memref<1x!tpu.dma_semaphore, #tpu.memory_space<semaphore_mem>>
    %83 = tpu.memref_squeeze %82 : memref<1x!tpu.dma_semaphore, #tpu.memory_space<semaphore_mem>> -> memref<!tpu.dma_semaphore, #tpu.memory_space<semaphore_mem>>
    tpu.wait_dma2 semaphore(%83 : memref<!tpu.dma_semaphore, #tpu.memory_space<semaphore_mem>>) src(%80 : memref<1x32xf32, #tpu.memory_space<any>>) dst(%81 : memref<1x32xf32, #tpu.memory_space<vmem>>)
    %c5_i32_59 = arith.constant 5 : i32
    %c0_i32_60 = arith.constant 0 : i32
    %84 = tpu.memref_slice %arg2[%43, %c0_i32_60] : memref<5000x32xf32, #tpu.memory_space<any>> -> memref<1x32xf32, #tpu.memory_space<any>>
    %c5_i32_61 = arith.constant 5 : i32
    %c0_i32_62 = arith.constant 0 : i32
    %85 = tpu.memref_slice %arg8[%c5_i32_61, %c0_i32_62] : memref<8x32xf32, #tpu.memory_space<vmem>> -> memref<1x32xf32, #tpu.memory_space<vmem>>
    %86 = tpu.memref_slice %arg9[%c5_i32_59] : memref<8x!tpu.dma_semaphore, #tpu.memory_space<semaphore_mem>> -> memref<1x!tpu.dma_semaphore, #tpu.memory_space<semaphore_mem>>
    %87 = tpu.memref_squeeze %86 : memref<1x!tpu.dma_semaphore, #tpu.memory_space<semaphore_mem>> -> memref<!tpu.dma_semaphore, #tpu.memory_space<semaphore_mem>>
    tpu.wait_dma2 semaphore(%87 : memref<!tpu.dma_semaphore, #tpu.memory_space<semaphore_mem>>) src(%84 : memref<1x32xf32, #tpu.memory_space<any>>) dst(%85 : memref<1x32xf32, #tpu.memory_space<vmem>>)
    %c6_i32_63 = arith.constant 6 : i32
    %c0_i32_64 = arith.constant 0 : i32
    %88 = tpu.memref_slice %arg2[%51, %c0_i32_64] : memref<5000x32xf32, #tpu.memory_space<any>> -> memref<1x32xf32, #tpu.memory_space<any>>
    %c6_i32_65 = arith.constant 6 : i32
    %c0_i32_66 = arith.constant 0 : i32
    %89 = tpu.memref_slice %arg8[%c6_i32_65, %c0_i32_66] : memref<8x32xf32, #tpu.memory_space<vmem>> -> memref<1x32xf32, #tpu.memory_space<vmem>>
    %90 = tpu.memref_slice %arg9[%c6_i32_63] : memref<8x!tpu.dma_semaphore, #tpu.memory_space<semaphore_mem>> -> memref<1x!tpu.dma_semaphore, #tpu.memory_space<semaphore_mem>>
    %91 = tpu.memref_squeeze %90 : memref<1x!tpu.dma_semaphore, #tpu.memory_space<semaphore_mem>> -> memref<!tpu.dma_semaphore, #tpu.memory_space<semaphore_mem>>
    tpu.wait_dma2 semaphore(%91 : memref<!tpu.dma_semaphore, #tpu.memory_space<semaphore_mem>>) src(%88 : memref<1x32xf32, #tpu.memory_space<any>>) dst(%89 : memref<1x32xf32, #tpu.memory_space<vmem>>)
    %c7_i32_67 = arith.constant 7 : i32
    %c0_i32_68 = arith.constant 0 : i32
    %92 = tpu.memref_slice %arg2[%59, %c0_i32_68] : memref<5000x32xf32, #tpu.memory_space<any>> -> memref<1x32xf32, #tpu.memory_space<any>>
    %c7_i32_69 = arith.constant 7 : i32
    %c0_i32_70 = arith.constant 0 : i32
    %93 = tpu.memref_slice %arg8[%c7_i32_69, %c0_i32_70] : memref<8x32xf32, #tpu.memory_space<vmem>> -> memref<1x32xf32, #tpu.memory_space<vmem>>
    %94 = tpu.memref_slice %arg9[%c7_i32_67] : memref<8x!tpu.dma_semaphore, #tpu.memory_space<semaphore_mem>> -> memref<1x!tpu.dma_semaphore, #tpu.memory_space<semaphore_mem>>
    %95 = tpu.memref_squeeze %94 : memref<1x!tpu.dma_semaphore, #tpu.memory_space<semaphore_mem>> -> memref<!tpu.dma_semaphore, #tpu.memory_space<semaphore_mem>>
    tpu.wait_dma2 semaphore(%95 : memref<!tpu.dma_semaphore, #tpu.memory_space<semaphore_mem>>) src(%92 : memref<1x32xf32, #tpu.memory_space<any>>) dst(%93 : memref<1x32xf32, #tpu.memory_space<vmem>>)
    %c0 = arith.constant 0 : index
    %c0_71 = arith.constant 0 : index
    %96 = vector.load %arg8[%c0, %c0_71] : memref<8x32xf32, #tpu.memory_space<vmem>>, vector<8x32xf32>
    %c0_72 = arith.constant 0 : index
    %c0_73 = arith.constant 0 : index
    %97 = vector.load %arg3[%c0_72, %c0_73] : memref<32x128xf32, #tpu.memory_space<vmem>>, vector<32x128xf32>
    %cst = arith.constant dense<0.000000e+00> : vector<8x128xf32>
    %98 = tpu.matmul %96, %97, %cst {dimension_numbers = #tpu.dot_dimension_numbers<[1], [0], [0], [1], [0, 0, 1, 1], [], []>} : vector<8x32xf32>, vector<32x128xf32>, vector<8x128xf32> -> vector<8x128xf32>
    %c0_74 = arith.constant 0 : index
    %c0_75 = arith.constant 0 : index
    %99 = vector.load %arg4[%c0_74, %c0_75] : memref<1x128xf32, #tpu.memory_space<vmem>>, vector<1x128xf32>
    %100 = vector.broadcast %99 : vector<1x128xf32> to vector<8x128xf32>
    %101 = arith.addf %98, %100 : vector<8x128xf32>
    %102 = arith.negf %101 : vector<8x128xf32>
    %103 = math.exp %102 : vector<8x128xf32>
    %cst_76 = arith.constant 1.000000e+00 : f32
    %104 = vector.broadcast %cst_76 : f32 to vector<8x128xf32>
    %105 = arith.addf %104, %103 : vector<8x128xf32>
    %106 = arith.divf %104, %105 : vector<8x128xf32>
    %107 = arith.mulf %101, %106 : vector<8x128xf32>
    %c0_77 = arith.constant 0 : index
    %c0_78 = arith.constant 0 : index
    %108 = vector.load %arg5[%c0_77, %c0_78] : memref<128x128xf32, #tpu.memory_space<vmem>>, vector<128x128xf32>
    %cst_79 = arith.constant dense<0.000000e+00> : vector<8x128xf32>
    %109 = tpu.matmul %107, %108, %cst_79 {dimension_numbers = #tpu.dot_dimension_numbers<[1], [0], [0], [1], [0, 0, 1, 1], [], []>} : vector<8x128xf32>, vector<128x128xf32>, vector<8x128xf32> -> vector<8x128xf32>
    %c0_80 = arith.constant 0 : index
    %c0_81 = arith.constant 0 : index
    %110 = vector.load %arg6[%c0_80, %c0_81] : memref<1x128xf32, #tpu.memory_space<vmem>>, vector<1x128xf32>
    %111 = vector.broadcast %110 : vector<1x128xf32> to vector<8x128xf32>
    %112 = arith.addf %109, %111 : vector<8x128xf32>
    %c0_82 = arith.constant 0 : index
    %c0_83 = arith.constant 0 : index
    %113 = vector.load %arg7[%c0_82, %c0_83] : memref<8x128xf32, #tpu.memory_space<vmem>>, vector<8x128xf32>
    tpu.vector_store %arg7[%c0_82, %c0_83], %112 {strides = array<i32>} : memref<8x128xf32, #tpu.memory_space<vmem>>, vector<8x128xf32>,
    return
  }
  func.func @transform_1(%arg0: i32, %arg1: memref<8xi32, #tpu.memory_space<smem>>) -> (i32, i32) {
    %c0_i32 = arith.constant 0 : i32
    %c0_i32_0 = arith.constant 0 : i32
    %c0_i32_1 = arith.constant 0 : i32
    return %c0_i32, %c0_i32_0 : i32, i32
  }
  func.func @transform_2(%arg0: i32, %arg1: memref<8xi32, #tpu.memory_space<smem>>) -> (i32, i32) {
    %c0_i32 = arith.constant 0 : i32
    %c0_i32_0 = arith.constant 0 : i32
    %c0_i32_1 = arith.constant 0 : i32
    return %c0_i32, %c0_i32_0 : i32, i32
  }
  func.func @transform_3(%arg0: i32, %arg1: memref<8xi32, #tpu.memory_space<smem>>) -> (i32, i32) {
    %c0_i32 = arith.constant 0 : i32
    %c0_i32_0 = arith.constant 0 : i32
    %c0_i32_1 = arith.constant 0 : i32
    return %c0_i32, %c0_i32_0 : i32, i32
  }
  func.func @transform_4(%arg0: i32, %arg1: memref<8xi32, #tpu.memory_space<smem>>) -> (i32, i32) {
    %c0_i32 = arith.constant 0 : i32
    %c0_i32_0 = arith.constant 0 : i32
    %c0_i32_1 = arith.constant 0 : i32
    return %c0_i32, %c0_i32_0 : i32, i32
  }
  func.func @transform_5(%arg0: i32, %arg1: memref<8xi32, #tpu.memory_space<smem>>) -> (i32, i32) {
    %c0_i32 = arith.constant 0 : i32
    %c0_i32_0 = arith.constant 0 : i32
    return %arg0, %c0_i32 : i32, i32
  }
}

</mosaic_0001>

<llo_original>
// kernel: tpu_custom_call.1
$region0: #{tpu_custom_call.1}
  #allocation0 [shape = 'u32[]', space=smem, size = 0x4, offset = 0x4, fixed_abs, tag = 'smem constant byte address 0x4 - core index']
  #allocation1 [shape = 'u32[144,128]{1,0:T(1,128)}', space=vmem, size = 0x12000, scoped, tag = 'internal scratch']
  #allocation2 [shape = 'f32[8,32]{1,0:T(8,128)}', space=vmem, size = 0x1000, scoped, tag = 'scratch operand']
  #allocation3 [shape = 's32[8]{0}', space=sflag, size = 0x20, scoped, tag = 'scratch operand']
  #allocation4 [shape = 's32[1]{0}', space=sflag, size = 0x4, scoped, tag = 'scoped memory for tpu_custom_call.1']
  #allocation5 [shape = 'u8[512]{0}', space=smem, size = 0x200, scoped, tag = 'prefetched SMEM operand 0']
  #allocation8 [shape = 's32[]', space=sflag, size = 0x4, offset = 0, fixed_abs, tag = 'sflag constant byte address 0x0 - dummy sync flag']
  #allocation9 [shape = 's32[]', space=sflag, size = 0x4, offset = 0, fixed_abs, tag = 'sflag constant byte address 0x0 - dummy sync flag']
  #allocation10 [shape = 's32[]', space=sflag, size = 0x4, offset = 0, fixed_abs, tag = 'sflag constant byte address 0x0 - dummy sync flag']
  #allocation11 [shape = 's32[]', space=sflag, size = 0x4, offset = 0, fixed_abs, tag = 'sflag constant byte address 0x0 - dummy sync flag']
  #allocation12 [shape = 's32[]', space=sflag, size = 0x4, offset = 0, fixed_abs, tag = 'sflag constant byte address 0x0 - dummy sync flag']
  #allocation13 [shape = 's32[]', space=sflag, size = 0x4, offset = 0, fixed_abs, tag = 'sflag constant byte address 0x0 - dummy sync flag']
  #allocation14 [shape = 's32[]', space=sflag, size = 0x4, offset = 0, fixed_abs, tag = 'sflag constant byte address 0x0 - dummy sync flag']
  #allocation15 [shape = 's32[]', space=sflag, size = 0x4, offset = 0, fixed_abs, tag = 'sflag constant byte address 0x0 - dummy sync flag']
  %s0 = inlined_call_operand.vmem [shape: s32[8], index: 0, kind: input, shape index: {}]
  %s1 = inlined_call_operand.vmem [shape: f32[5000,32], index: 1, kind: input, shape index: {}]
  %s2 = inlined_call_operand.vmem [shape: f32[32,128], index: 2, kind: input, shape index: {}]
  %s3 = inlined_call_operand.vmem [shape: f32[1,128], index: 3, kind: input, shape index: {}]
  %s4 = inlined_call_operand.vmem [shape: f32[128,128], index: 4, kind: input, shape index: {}]
  %s5 = inlined_call_operand.vmem [shape: f32[1,128], index: 5, kind: input, shape index: {}]
  %s6 = inlined_call_operand.hbm [shape: f32[8,128], index: 6, kind: output, shape index: {}]
  %s7 = sld [smem:[#allocation0]]
  $region266: #{tpu_custom_call.1} parent=0
    _
  %s9 = ssub.s32 1, %s7
  %s10 = scalar_select 0, %s9, %s7
  %s11 = sshll.u32 %s0, 4
  %s12 = int_to_ptr.vmem [resolvable:$true] %s11
  %14 = dma.vmem_to_smem %s12, 16, [#allocation5], [#allocation4]
  %15 = dma.done [#allocation4], 16
  %16 = sfence
  $region1: #{tpu_custom_call.1} parent=0
    #allocation6 [shape = 'u8[4096]{0}', space=vmem, size = 0x1000, scoped, tag = 'output window, operand 0, single buffered']
    #allocation7 [shape = 's32[1]{0}', space=sflag, size = 0x4, scoped, tag = 'scoped memory for tpu_custom_call.1']
    %17 = vsyncpa [#allocation7], 0
    // Predicated region
    $region2: #{tpu_custom_call.1} parent=1 // pred_check
      _
    $region3: #{tpu_custom_call.1} parent=1 // pred_check_branch
      %19 = sbr.rel (0) target = $region5
    $region4: #{tpu_custom_call.1} parent=1 // pred_region
      _
    $region5: #{tpu_custom_call.1} parent=1 // pred_fallthru
      _
    // Predicated region
    $region6: #{tpu_custom_call.1} parent=1 // pred_check
      _
    $region7: #{tpu_custom_call.1} parent=1 // pred_check_branch
      %21 = sbr.rel (0) target = $region9
    $region8: #{tpu_custom_call.1} parent=1 // pred_region
      _
    $region9: #{tpu_custom_call.1} parent=1 // pred_fallthru
      _
    // Predicated region
    $region10: #{tpu_custom_call.1} parent=1 // pred_check
      _
    $region11: #{tpu_custom_call.1} parent=1 // pred_check_branch
      %23 = sbr.rel (0) target = $region13
    $region12: #{tpu_custom_call.1} parent=1 // pred_region
      _
    $region13: #{tpu_custom_call.1} parent=1 // pred_fallthru
      _
    // Predicated region
    $region14: #{tpu_custom_call.1} parent=1 // pred_check
      _
    $region15: #{tpu_custom_call.1} parent=1 // pred_check_branch
      %25 = sbr.rel (0) target = $region17
    $region16: #{tpu_custom_call.1} parent=1 // pred_region
      _
    $region17: #{tpu_custom_call.1} parent=1 // pred_fallthru
      _
    %s26 = smul.u32 0, 8
    %s27 = sld [smem:[#allocation5 + %s26]]
    %s28 = scalar_lea.vmem %s1, %s27
    %p30 = scmp.lt.u32.totalorder 1, 8
    %p31 = pneg %p30
    // Predicated region
    $region18: #{tpu_custom_call.1} parent=1 // pred_check
      _
    $region19: #{tpu_custom_call.1} parent=1 // pred_check_branch
      %33 = sbr.rel (%p30) target = $region21
    $region20: #{tpu_custom_call.1} parent=1 // pred_region
      %s49 = sand.u32 1, 7
      %p50 = scmp.eq.s32.totalorder %s49, 0
      %p51 = pneg %p50
      // Predicated region
      $region33: #{tpu_custom_call.1} parent=20 // pred_check
        _
      $region34: #{tpu_custom_call.1} parent=20 // pred_check_branch
        %53 = sbr.rel (%p50) target = $region36
      $region35: #{tpu_custom_call.1} parent=20 // pred_region
        %s54 = sand.u32 1, 7
        %s55 = ssub.s32 1, %s54
        %s56 = scalar_lea.vmem %s28, %s55
        %s57 = ssub.s32 1, %s54
        %s58 = scalar_lea.vmem [#allocation2], %s57
        %s59 = sshll.u32 1, %s54
        %s60 = ssub.s32 %s59, 1
        loop: start=0, step=1, limit=1
        $region37: #{tpu_custom_call.1} parent=35 // loop_pre_header
          _
        $region38: #{tpu_custom_call.1} parent=35 // loop_header
          %s62 = sphi 0, %s66
          %p63 = scmp.ge.s32.totalorder %s62, 1
          %s67 = sphi %s56, %s56
          %s68 = sphi %s58, %s58
        $region39: #{tpu_custom_call.1} parent=35 // loop_header_branch
          %65 = sbr.rel (%p63) target = $region43
        $region40: #{tpu_custom_call.1} parent=35 // loop_body
          %v69 = vld [vmem:[%s67] sm:%s60]
          %70 = vst [vmem:[%s68] sm:%s60] %v69
        $region41: #{tpu_custom_call.1} parent=35 // loop_footer
          %s66 = sadd.s32 1, %s62
        $region42: #{tpu_custom_call.1} parent=35 // loop_footer_branch
          %61 = sbr.rel target = $region38
        $region43: #{tpu_custom_call.1} parent=35 // loop_exit
          _
      $region36: #{tpu_custom_call.1} parent=20 // pred_fallthru
        _
    $region21: #{tpu_custom_call.1} parent=1 // pred_fallthru
      _
    // Predicated region
    $region22: #{tpu_custom_call.1} parent=1 // pred_check
      %p34 = pneg %p30
    $region23: #{tpu_custom_call.1} parent=1 // pred_check_branch
      %36 = sbr.rel (%p34) target = $region25
    $region24: #{tpu_custom_call.1} parent=1 // pred_region
      %s37 = sshll.u32 1, 1
      %s38 = ssub.s32 %s37, 1
      loop: start=0, step=1, limit=1
      $region26: #{tpu_custom_call.1} parent=24 // loop_pre_header
        _
      $region27: #{tpu_custom_call.1} parent=24 // loop_header
        %s40 = sphi 0, %s44
        %p41 = scmp.ge.s32.totalorder %s40, 1
        %s45 = sphi %s28, %s28
        %s46 = sphi [#allocation2], [#allocation2]
      $region28: #{tpu_custom_call.1} parent=24 // loop_header_branch
        %43 = sbr.rel (%p41) target = $region32
      $region29: #{tpu_custom_call.1} parent=24 // loop_body
        %v47 = vld [vmem:[%s45] sm:%s38]
        %48 = vst [vmem:[%s46] sm:%s38] %v47
      $region30: #{tpu_custom_call.1} parent=24 // loop_footer
        %s44 = sadd.s32 1, %s40
      $region31: #{tpu_custom_call.1} parent=24 // loop_footer_branch
        %39 = sbr.rel target = $region27
      $region32: #{tpu_custom_call.1} parent=24 // loop_exit
        _
    $region25: #{tpu_custom_call.1} parent=1 // pred_fallthru
      _
    // Predicated region
    $region44: #{tpu_custom_call.1} parent=1 // pred_check
      _
    $region45: #{tpu_custom_call.1} parent=1 // pred_check_branch
      %73 = sbr.rel (0) target = $region47
    $region46: #{tpu_custom_call.1} parent=1 // pred_region
      %74 = vsyncadd [#allocation3], 16
    $region47: #{tpu_custom_call.1} parent=1 // pred_fallthru
      _
    %s75 = sadd.s32 %s26, 1
    %s76 = sld [smem:[#allocation5 + %s75]]
    %s77 = scalar_lea.vmem %s1, %s76
    %s78 = scalar_lea.vmem [#allocation2], 1
    %s79 = scalar_lea.sflag [#allocation3], 1
    %p81 = scmp.lt.u32.totalorder 1, 8
    %p82 = pneg %p81
    // Predicated region
    $region48: #{tpu_custom_call.1} parent=1 // pred_check
      _
    $region49: #{tpu_custom_call.1} parent=1 // pred_check_branch
      %84 = sbr.rel (%p81) target = $region51
    $region50: #{tpu_custom_call.1} parent=1 // pred_region
      %s100 = sand.u32 1, 7
      %p101 = scmp.eq.s32.totalorder %s100, 0
      %p102 = pneg %p101
      // Predicated region
      $region63: #{tpu_custom_call.1} parent=50 // pred_check
        _
      $region64: #{tpu_custom_call.1} parent=50 // pred_check_branch
        %104 = sbr.rel (%p101) target = $region66
      $region65: #{tpu_custom_call.1} parent=50 // pred_region
        %s105 = sand.u32 1, 7
        %s106 = ssub.s32 1, %s105
        %s107 = scalar_lea.vmem %s77, %s106
        %s108 = ssub.s32 1, %s105
        %s109 = scalar_lea.vmem %s78, %s108 [#allocation2]
        %s110 = sshll.u32 1, %s105
        %s111 = ssub.s32 %s110, 1
        loop: start=0, step=1, limit=1
        $region67: #{tpu_custom_call.1} parent=65 // loop_pre_header
          _
        $region68: #{tpu_custom_call.1} parent=65 // loop_header
          %s113 = sphi 0, %s117
          %p114 = scmp.ge.s32.totalorder %s113, 1
          %s118 = sphi %s107, %s107
          %s119 = sphi %s109, %s109
        $region69: #{tpu_custom_call.1} parent=65 // loop_header_branch
          %116 = sbr.rel (%p114) target = $region73
        $region70: #{tpu_custom_call.1} parent=65 // loop_body
          %v120 = vld [vmem:[%s118] sm:%s111]
          %121 = vst [vmem:[%s119] sm:%s111] %v120
        $region71: #{tpu_custom_call.1} parent=65 // loop_footer
          %s117 = sadd.s32 1, %s113
        $region72: #{tpu_custom_call.1} parent=65 // loop_footer_branch
          %112 = sbr.rel target = $region68
        $region73: #{tpu_custom_call.1} parent=65 // loop_exit
          _
      $region66: #{tpu_custom_call.1} parent=50 // pred_fallthru
        _
    $region51: #{tpu_custom_call.1} parent=1 // pred_fallthru
      _
    // Predicated region
    $region52: #{tpu_custom_call.1} parent=1 // pred_check
      %p85 = pneg %p81
    $region53: #{tpu_custom_call.1} parent=1 // pred_check_branch
      %87 = sbr.rel (%p85) target = $region55
    $region54: #{tpu_custom_call.1} parent=1 // pred_region
      %s88 = sshll.u32 1, 1
      %s89 = ssub.s32 %s88, 1
      loop: start=0, step=1, limit=1
      $region56: #{tpu_custom_call.1} parent=54 // loop_pre_header
        _
      $region57: #{tpu_custom_call.1} parent=54 // loop_header
        %s91 = sphi 0, %s95
        %p92 = scmp.ge.s32.totalorder %s91, 1
        %s96 = sphi %s77, %s77
        %s97 = sphi %s78, %s78
      $region58: #{tpu_custom_call.1} parent=54 // loop_header_branch
        %94 = sbr.rel (%p92) target = $region62
      $region59: #{tpu_custom_call.1} parent=54 // loop_body
        %v98 = vld [vmem:[%s96] sm:%s89]
        %99 = vst [vmem:[%s97] sm:%s89] %v98
      $region60: #{tpu_custom_call.1} parent=54 // loop_footer
        %s95 = sadd.s32 1, %s91
      $region61: #{tpu_custom_call.1} parent=54 // loop_footer_branch
        %90 = sbr.rel target = $region57
      $region62: #{tpu_custom_call.1} parent=54 // loop_exit
        _
    $region55: #{tpu_custom_call.1} parent=1 // pred_fallthru
      _
    // Predicated region
    $region74: #{tpu_custom_call.1} parent=1 // pred_check
      _
    $region75: #{tpu_custom_call.1} parent=1 // pred_check_branch
      %124 = sbr.rel (0) target = $region77
    $region76: #{tpu_custom_call.1} parent=1 // pred_region
      %125 = vsyncadd %s79, 16
    $region77: #{tpu_custom_call.1} parent=1 // pred_fallthru
      _
    %s126 = sadd.s32 %s26, 2
    %s127 = sld [smem:[#allocation5 + %s126]]
    %s128 = scalar_lea.vmem %s1, %s127
    %s129 = scalar_lea.vmem [#allocation2], 2
    %s130 = scalar_lea.sflag [#allocation3], 2
    %p132 = scmp.lt.u32.totalorder 1, 8
    %p133 = pneg %p132
    // Predicated region
    $region78: #{tpu_custom_call.1} parent=1 // pred_check
      _
    $region79: #{tpu_custom_call.1} parent=1 // pred_check_branch
      %135 = sbr.rel (%p132) target = $region81
    $region80: #{tpu_custom_call.1} parent=1 // pred_region
      %s151 = sand.u32 1, 7
      %p152 = scmp.eq.s32.totalorder %s151, 0
      %p153 = pneg %p152
      // Predicated region
      $region93: #{tpu_custom_call.1} parent=80 // pred_check
        _
      $region94: #{tpu_custom_call.1} parent=80 // pred_check_branch
        %155 = sbr.rel (%p152) target = $region96
      $region95: #{tpu_custom_call.1} parent=80 // pred_region
        %s156 = sand.u32 1, 7
        %s157 = ssub.s32 1, %s156
        %s158 = scalar_lea.vmem %s128, %s157
        %s159 = ssub.s32 1, %s156
        %s160 = scalar_lea.vmem %s129, %s159 [#allocation2]
        %s161 = sshll.u32 1, %s156
        %s162 = ssub.s32 %s161, 1
        loop: start=0, step=1, limit=1
        $region97: #{tpu_custom_call.1} parent=95 // loop_pre_header
          _
        $region98: #{tpu_custom_call.1} parent=95 // loop_header
          %s164 = sphi 0, %s168
          %p165 = scmp.ge.s32.totalorder %s164, 1
          %s169 = sphi %s158, %s158
          %s170 = sphi %s160, %s160
        $region99: #{tpu_custom_call.1} parent=95 // loop_header_branch
          %167 = sbr.rel (%p165) target = $region103
        $region100: #{tpu_custom_call.1} parent=95 // loop_body
          %v171 = vld [vmem:[%s169] sm:%s162]
          %172 = vst [vmem:[%s170] sm:%s162] %v171
        $region101: #{tpu_custom_call.1} parent=95 // loop_footer
          %s168 = sadd.s32 1, %s164
        $region102: #{tpu_custom_call.1} parent=95 // loop_footer_branch
          %163 = sbr.rel target = $region98
        $region103: #{tpu_custom_call.1} parent=95 // loop_exit
          _
      $region96: #{tpu_custom_call.1} parent=80 // pred_fallthru
        _
    $region81: #{tpu_custom_call.1} parent=1 // pred_fallthru
      _
    // Predicated region
    $region82: #{tpu_custom_call.1} parent=1 // pred_check
      %p136 = pneg %p132
    $region83: #{tpu_custom_call.1} parent=1 // pred_check_branch
      %138 = sbr.rel (%p136) target = $region85
    $region84: #{tpu_custom_call.1} parent=1 // pred_region
      %s139 = sshll.u32 1, 1
      %s140 = ssub.s32 %s139, 1
      loop: start=0, step=1, limit=1
      $region86: #{tpu_custom_call.1} parent=84 // loop_pre_header
        _
      $region87: #{tpu_custom_call.1} parent=84 // loop_header
        %s142 = sphi 0, %s146
        %p143 = scmp.ge.s32.totalorder %s142, 1
        %s147 = sphi %s128, %s128
        %s148 = sphi %s129, %s129
      $region88: #{tpu_custom_call.1} parent=84 // loop_header_branch
        %145 = sbr.rel (%p143) target = $region92
      $region89: #{tpu_custom_call.1} parent=84 // loop_body
        %v149 = vld [vmem:[%s147] sm:%s140]
        %150 = vst [vmem:[%s148] sm:%s140] %v149
      $region90: #{tpu_custom_call.1} parent=84 // loop_footer
        %s146 = sadd.s32 1, %s142
      $region91: #{tpu_custom_call.1} parent=84 // loop_footer_branch
        %141 = sbr.rel target = $region87
      $region92: #{tpu_custom_call.1} parent=84 // loop_exit
        _
    $region85: #{tpu_custom_call.1} parent=1 // pred_fallthru
      _
    // Predicated region
    $region104: #{tpu_custom_call.1} parent=1 // pred_check
      _
    $region105: #{tpu_custom_call.1} parent=1 // pred_check_branch
      %175 = sbr.rel (0) target = $region107
    $region106: #{tpu_custom_call.1} parent=1 // pred_region
      %176 = vsyncadd %s130, 16
    $region107: #{tpu_custom_call.1} parent=1 // pred_fallthru
      _
    %s177 = sadd.s32 %s26, 3
    %s178 = sld [smem:[#allocation5 + %s177]]
    %s179 = scalar_lea.vmem %s1, %s178
    %s180 = scalar_lea.vmem [#allocation2], 3
    %s181 = scalar_lea.sflag [#allocation3], 3
    %p183 = scmp.lt.u32.totalorder 1, 8
    %p184 = pneg %p183
    // Predicated region
    $region108: #{tpu_custom_call.1} parent=1 // pred_check
      _
    $region109: #{tpu_custom_call.1} parent=1 // pred_check_branch
      %186 = sbr.rel (%p183) target = $region111
    $region110: #{tpu_custom_call.1} parent=1 // pred_region
      %s202 = sand.u32 1, 7
      %p203 = scmp.eq.s32.totalorder %s202, 0
      %p204 = pneg %p203
      // Predicated region
      $region123: #{tpu_custom_call.1} parent=110 // pred_check
        _
      $region124: #{tpu_custom_call.1} parent=110 // pred_check_branch
        %206 = sbr.rel (%p203) target = $region126
      $region125: #{tpu_custom_call.1} parent=110 // pred_region
        %s207 = sand.u32 1, 7
        %s208 = ssub.s32 1, %s207
        %s209 = scalar_lea.vmem %s179, %s208
        %s210 = ssub.s32 1, %s207
        %s211 = scalar_lea.vmem %s180, %s210 [#allocation2]
        %s212 = sshll.u32 1, %s207
        %s213 = ssub.s32 %s212, 1
        loop: start=0, step=1, limit=1
        $region127: #{tpu_custom_call.1} parent=125 // loop_pre_header
          _
        $region128: #{tpu_custom_call.1} parent=125 // loop_header
          %s215 = sphi 0, %s219
          %p216 = scmp.ge.s32.totalorder %s215, 1
          %s220 = sphi %s209, %s209
          %s221 = sphi %s211, %s211
        $region129: #{tpu_custom_call.1} parent=125 // loop_header_branch
          %218 = sbr.rel (%p216) target = $region133
        $region130: #{tpu_custom_call.1} parent=125 // loop_body
          %v222 = vld [vmem:[%s220] sm:%s213]
          %223 = vst [vmem:[%s221] sm:%s213] %v222
        $region131: #{tpu_custom_call.1} parent=125 // loop_footer
          %s219 = sadd.s32 1, %s215
        $region132: #{tpu_custom_call.1} parent=125 // loop_footer_branch
          %214 = sbr.rel target = $region128
        $region133: #{tpu_custom_call.1} parent=125 // loop_exit
          _
      $region126: #{tpu_custom_call.1} parent=110 // pred_fallthru
        _
    $region111: #{tpu_custom_call.1} parent=1 // pred_fallthru
      _
    // Predicated region
    $region112: #{tpu_custom_call.1} parent=1 // pred_check
      %p187 = pneg %p183
    $region113: #{tpu_custom_call.1} parent=1 // pred_check_branch
      %189 = sbr.rel (%p187) target = $region115
    $region114: #{tpu_custom_call.1} parent=1 // pred_region
      %s190 = sshll.u32 1, 1
      %s191 = ssub.s32 %s190, 1
      loop: start=0, step=1, limit=1
      $region116: #{tpu_custom_call.1} parent=114 // loop_pre_header
        _
      $region117: #{tpu_custom_call.1} parent=114 // loop_header
        %s193 = sphi 0, %s197
        %p194 = scmp.ge.s32.totalorder %s193, 1
        %s198 = sphi %s179, %s179
        %s199 = sphi %s180, %s180
      $region118: #{tpu_custom_call.1} parent=114 // loop_header_branch
        %196 = sbr.rel (%p194) target = $region122
      $region119: #{tpu_custom_call.1} parent=114 // loop_body
        %v200 = vld [vmem:[%s198] sm:%s191]
        %201 = vst [vmem:[%s199] sm:%s191] %v200
      $region120: #{tpu_custom_call.1} parent=114 // loop_footer
        %s197 = sadd.s32 1, %s193
      $region121: #{tpu_custom_call.1} parent=114 // loop_footer_branch
        %192 = sbr.rel target = $region117
      $region122: #{tpu_custom_call.1} parent=114 // loop_exit
        _
    $region115: #{tpu_custom_call.1} parent=1 // pred_fallthru
      _
    // Predicated region
    $region134: #{tpu_custom_call.1} parent=1 // pred_check
      _
    $region135: #{tpu_custom_call.1} parent=1 // pred_check_branch
      %226 = sbr.rel (0) target = $region137
    $region136: #{tpu_custom_call.1} parent=1 // pred_region
      %227 = vsyncadd %s181, 16
    $region137: #{tpu_custom_call.1} parent=1 // pred_fallthru
      _
    %s228 = sadd.s32 %s26, 4
    %s229 = sld [smem:[#allocation5 + %s228]]
    %s230 = scalar_lea.vmem %s1, %s229
    %s231 = scalar_lea.vmem [#allocation2], 4
    %s232 = scalar_lea.sflag [#allocation3], 4
    %p234 = scmp.lt.u32.totalorder 1, 8
    %p235 = pneg %p234
    // Predicated region
    $region138: #{tpu_custom_call.1} parent=1 // pred_check
      _
    $region139: #{tpu_custom_call.1} parent=1 // pred_check_branch
      %237 = sbr.rel (%p234) target = $region141
    $region140: #{tpu_custom_call.1} parent=1 // pred_region
      %s253 = sand.u32 1, 7
      %p254 = scmp.eq.s32.totalorder %s253, 0
      %p255 = pneg %p254
      // Predicated region
      $region153: #{tpu_custom_call.1} parent=140 // pred_check
        _
      $region154: #{tpu_custom_call.1} parent=140 // pred_check_branch
        %257 = sbr.rel (%p254) target = $region156
      $region155: #{tpu_custom_call.1} parent=140 // pred_region
        %s258 = sand.u32 1, 7
        %s259 = ssub.s32 1, %s258
        %s260 = scalar_lea.vmem %s230, %s259
        %s261 = ssub.s32 1, %s258
        %s262 = scalar_lea.vmem %s231, %s261 [#allocation2]
        %s263 = sshll.u32 1, %s258
        %s264 = ssub.s32 %s263, 1
        loop: start=0, step=1, limit=1
        $region157: #{tpu_custom_call.1} parent=155 // loop_pre_header
          _
        $region158: #{tpu_custom_call.1} parent=155 // loop_header
          %s266 = sphi 0, %s270
          %p267 = scmp.ge.s32.totalorder %s266, 1
          %s271 = sphi %s260, %s260
          %s272 = sphi %s262, %s262
        $region159: #{tpu_custom_call.1} parent=155 // loop_header_branch
          %269 = sbr.rel (%p267) target = $region163
        $region160: #{tpu_custom_call.1} parent=155 // loop_body
          %v273 = vld [vmem:[%s271] sm:%s264]
          %274 = vst [vmem:[%s272] sm:%s264] %v273
        $region161: #{tpu_custom_call.1} parent=155 // loop_footer
          %s270 = sadd.s32 1, %s266
        $region162: #{tpu_custom_call.1} parent=155 // loop_footer_branch
          %265 = sbr.rel target = $region158
        $region163: #{tpu_custom_call.1} parent=155 // loop_exit
          _
      $region156: #{tpu_custom_call.1} parent=140 // pred_fallthru
        _
    $region141: #{tpu_custom_call.1} parent=1 // pred_fallthru
      _
    // Predicated region
    $region142: #{tpu_custom_call.1} parent=1 // pred_check
      %p238 = pneg %p234
    $region143: #{tpu_custom_call.1} parent=1 // pred_check_branch
      %240 = sbr.rel (%p238) target = $region145
    $region144: #{tpu_custom_call.1} parent=1 // pred_region
      %s241 = sshll.u32 1, 1
      %s242 = ssub.s32 %s241, 1
      loop: start=0, step=1, limit=1
      $region146: #{tpu_custom_call.1} parent=144 // loop_pre_header
        _
      $region147: #{tpu_custom_call.1} parent=144 // loop_header
        %s244 = sphi 0, %s248
        %p245 = scmp.ge.s32.totalorder %s244, 1
        %s249 = sphi %s230, %s230
        %s250 = sphi %s231, %s231
      $region148: #{tpu_custom_call.1} parent=144 // loop_header_branch
        %247 = sbr.rel (%p245) target = $region152
      $region149: #{tpu_custom_call.1} parent=144 // loop_body
        %v251 = vld [vmem:[%s249] sm:%s242]
        %252 = vst [vmem:[%s250] sm:%s242] %v251
      $region150: #{tpu_custom_call.1} parent=144 // loop_footer
        %s248 = sadd.s32 1, %s244
      $region151: #{tpu_custom_call.1} parent=144 // loop_footer_branch
        %243 = sbr.rel target = $region147
      $region152: #{tpu_custom_call.1} parent=144 // loop_exit
        _
    $region145: #{tpu_custom_call.1} parent=1 // pred_fallthru
      _
    // Predicated region
    $region164: #{tpu_custom_call.1} parent=1 // pred_check
      _
    $region165: #{tpu_custom_call.1} parent=1 // pred_check_branch
      %277 = sbr.rel (0) target = $region167
    $region166: #{tpu_custom_call.1} parent=1 // pred_region
      %278 = vsyncadd %s232, 16
    $region167: #{tpu_custom_call.1} parent=1 // pred_fallthru
      _
    %s279 = sadd.s32 %s26, 5
    %s280 = sld [smem:[#allocation5 + %s279]]
    %s281 = scalar_lea.vmem %s1, %s280
    %s282 = scalar_lea.vmem [#allocation2], 5
    %s283 = scalar_lea.sflag [#allocation3], 5
    %p285 = scmp.lt.u32.totalorder 1, 8
    %p286 = pneg %p285
    // Predicated region
    $region168: #{tpu_custom_call.1} parent=1 // pred_check
      _
    $region169: #{tpu_custom_call.1} parent=1 // pred_check_branch
      %288 = sbr.rel (%p285) target = $region171
    $region170: #{tpu_custom_call.1} parent=1 // pred_region
      %s304 = sand.u32 1, 7
      %p305 = scmp.eq.s32.totalorder %s304, 0
      %p306 = pneg %p305
      // Predicated region
      $region183: #{tpu_custom_call.1} parent=170 // pred_check
        _
      $region184: #{tpu_custom_call.1} parent=170 // pred_check_branch
        %308 = sbr.rel (%p305) target = $region186
      $region185: #{tpu_custom_call.1} parent=170 // pred_region
        %s309 = sand.u32 1, 7
        %s310 = ssub.s32 1, %s309
        %s311 = scalar_lea.vmem %s281, %s310
        %s312 = ssub.s32 1, %s309
        %s313 = scalar_lea.vmem %s282, %s312 [#allocation2]
        %s314 = sshll.u32 1, %s309
        %s315 = ssub.s32 %s314, 1
        loop: start=0, step=1, limit=1
        $region187: #{tpu_custom_call.1} parent=185 // loop_pre_header
          _
        $region188: #{tpu_custom_call.1} parent=185 // loop_header
          %s317 = sphi 0, %s321
          %p318 = scmp.ge.s32.totalorder %s317, 1
          %s322 = sphi %s311, %s311
          %s323 = sphi %s313, %s313
        $region189: #{tpu_custom_call.1} parent=185 // loop_header_branch
          %320 = sbr.rel (%p318) target = $region193
        $region190: #{tpu_custom_call.1} parent=185 // loop_body
          %v324 = vld [vmem:[%s322] sm:%s315]
          %325 = vst [vmem:[%s323] sm:%s315] %v324
        $region191: #{tpu_custom_call.1} parent=185 // loop_footer
          %s321 = sadd.s32 1, %s317
        $region192: #{tpu_custom_call.1} parent=185 // loop_footer_branch
          %316 = sbr.rel target = $region188
        $region193: #{tpu_custom_call.1} parent=185 // loop_exit
          _
      $region186: #{tpu_custom_call.1} parent=170 // pred_fallthru
        _
    $region171: #{tpu_custom_call.1} parent=1 // pred_fallthru
      _
    // Predicated region
    $region172: #{tpu_custom_call.1} parent=1 // pred_check
      %p289 = pneg %p285
    $region173: #{tpu_custom_call.1} parent=1 // pred_check_branch
      %291 = sbr.rel (%p289) target = $region175
    $region174: #{tpu_custom_call.1} parent=1 // pred_region
      %s292 = sshll.u32 1, 1
      %s293 = ssub.s32 %s292, 1
      loop: start=0, step=1, limit=1
      $region176: #{tpu_custom_call.1} parent=174 // loop_pre_header
        _
      $region177: #{tpu_custom_call.1} parent=174 // loop_header
        %s295 = sphi 0, %s299
        %p296 = scmp.ge.s32.totalorder %s295, 1
        %s300 = sphi %s281, %s281
        %s301 = sphi %s282, %s282
      $region178: #{tpu_custom_call.1} parent=174 // loop_header_branch
        %298 = sbr.rel (%p296) target = $region182
      $region179: #{tpu_custom_call.1} parent=174 // loop_body
        %v302 = vld [vmem:[%s300] sm:%s293]
        %303 = vst [vmem:[%s301] sm:%s293] %v302
      $region180: #{tpu_custom_call.1} parent=174 // loop_footer
        %s299 = sadd.s32 1, %s295
      $region181: #{tpu_custom_call.1} parent=174 // loop_footer_branch
        %294 = sbr.rel target = $region177
      $region182: #{tpu_custom_call.1} parent=174 // loop_exit
        _
    $region175: #{tpu_custom_call.1} parent=1 // pred_fallthru
      _
    // Predicated region
    $region194: #{tpu_custom_call.1} parent=1 // pred_check
      _
    $region195: #{tpu_custom_call.1} parent=1 // pred_check_branch
      %328 = sbr.rel (0) target = $region197
    $region196: #{tpu_custom_call.1} parent=1 // pred_region
      %329 = vsyncadd %s283, 16
    $region197: #{tpu_custom_call.1} parent=1 // pred_fallthru
      _
    %s330 = sadd.s32 %s26, 6
    %s331 = sld [smem:[#allocation5 + %s330]]
    %s332 = scalar_lea.vmem %s1, %s331
    %s333 = scalar_lea.vmem [#allocation2], 6
    %s334 = scalar_lea.sflag [#allocation3], 6
    %p336 = scmp.lt.u32.totalorder 1, 8
    %p337 = pneg %p336
    // Predicated region
    $region198: #{tpu_custom_call.1} parent=1 // pred_check
      _
    $region199: #{tpu_custom_call.1} parent=1 // pred_check_branch
      %339 = sbr.rel (%p336) target = $region201
    $region200: #{tpu_custom_call.1} parent=1 // pred_region
      %s355 = sand.u32 1, 7
      %p356 = scmp.eq.s32.totalorder %s355, 0
      %p357 = pneg %p356
      // Predicated region
      $region213: #{tpu_custom_call.1} parent=200 // pred_check
        _
      $region214: #{tpu_custom_call.1} parent=200 // pred_check_branch
        %359 = sbr.rel (%p356) target = $region216
      $region215: #{tpu_custom_call.1} parent=200 // pred_region
        %s360 = sand.u32 1, 7
        %s361 = ssub.s32 1, %s360
        %s362 = scalar_lea.vmem %s332, %s361
        %s363 = ssub.s32 1, %s360
        %s364 = scalar_lea.vmem %s333, %s363 [#allocation2]
        %s365 = sshll.u32 1, %s360
        %s366 = ssub.s32 %s365, 1
        loop: start=0, step=1, limit=1
        $region217: #{tpu_custom_call.1} parent=215 // loop_pre_header
          _
        $region218: #{tpu_custom_call.1} parent=215 // loop_header
          %s368 = sphi 0, %s372
          %p369 = scmp.ge.s32.totalorder %s368, 1
          %s373 = sphi %s362, %s362
          %s374 = sphi %s364, %s364
        $region219: #{tpu_custom_call.1} parent=215 // loop_header_branch
          %371 = sbr.rel (%p369) target = $region223
        $region220: #{tpu_custom_call.1} parent=215 // loop_body
          %v375 = vld [vmem:[%s373] sm:%s366]
          %376 = vst [vmem:[%s374] sm:%s366] %v375
        $region221: #{tpu_custom_call.1} parent=215 // loop_footer
          %s372 = sadd.s32 1, %s368
        $region222: #{tpu_custom_call.1} parent=215 // loop_footer_branch
          %367 = sbr.rel target = $region218
        $region223: #{tpu_custom_call.1} parent=215 // loop_exit
          _
      $region216: #{tpu_custom_call.1} parent=200 // pred_fallthru
        _
    $region201: #{tpu_custom_call.1} parent=1 // pred_fallthru
      _
    // Predicated region
    $region202: #{tpu_custom_call.1} parent=1 // pred_check
      %p340 = pneg %p336
    $region203: #{tpu_custom_call.1} parent=1 // pred_check_branch
      %342 = sbr.rel (%p340) target = $region205
    $region204: #{tpu_custom_call.1} parent=1 // pred_region
      %s343 = sshll.u32 1, 1
      %s344 = ssub.s32 %s343, 1
      loop: start=0, step=1, limit=1
      $region206: #{tpu_custom_call.1} parent=204 // loop_pre_header
        _
      $region207: #{tpu_custom_call.1} parent=204 // loop_header
        %s346 = sphi 0, %s350
        %p347 = scmp.ge.s32.totalorder %s346, 1
        %s351 = sphi %s332, %s332
        %s352 = sphi %s333, %s333
      $region208: #{tpu_custom_call.1} parent=204 // loop_header_branch
        %349 = sbr.rel (%p347) target = $region212
      $region209: #{tpu_custom_call.1} parent=204 // loop_body
        %v353 = vld [vmem:[%s351] sm:%s344]
        %354 = vst [vmem:[%s352] sm:%s344] %v353
      $region210: #{tpu_custom_call.1} parent=204 // loop_footer
        %s350 = sadd.s32 1, %s346
      $region211: #{tpu_custom_call.1} parent=204 // loop_footer_branch
        %345 = sbr.rel target = $region207
      $region212: #{tpu_custom_call.1} parent=204 // loop_exit
        _
    $region205: #{tpu_custom_call.1} parent=1 // pred_fallthru
      _
    // Predicated region
    $region224: #{tpu_custom_call.1} parent=1 // pred_check
      _
    $region225: #{tpu_custom_call.1} parent=1 // pred_check_branch
      %379 = sbr.rel (0) target = $region227
    $region226: #{tpu_custom_call.1} parent=1 // pred_region
      %380 = vsyncadd %s334, 16
    $region227: #{tpu_custom_call.1} parent=1 // pred_fallthru
      _
    %s381 = sadd.s32 %s26, 7
    %s382 = sld [smem:[#allocation5 + %s381]]
    %s383 = scalar_lea.vmem %s1, %s382
    %s384 = scalar_lea.vmem [#allocation2], 7
    %s385 = scalar_lea.sflag [#allocation3], 7
    %p387 = scmp.lt.u32.totalorder 1, 8
    %p388 = pneg %p387
    // Predicated region
    $region228: #{tpu_custom_call.1} parent=1 // pred_check
      _
    $region229: #{tpu_custom_call.1} parent=1 // pred_check_branch
      %390 = sbr.rel (%p387) target = $region231
    $region230: #{tpu_custom_call.1} parent=1 // pred_region
      %s406 = sand.u32 1, 7
      %p407 = scmp.eq.s32.totalorder %s406, 0
      %p408 = pneg %p407
      // Predicated region
      $region243: #{tpu_custom_call.1} parent=230 // pred_check
        _
      $region244: #{tpu_custom_call.1} parent=230 // pred_check_branch
        %410 = sbr.rel (%p407) target = $region246
      $region245: #{tpu_custom_call.1} parent=230 // pred_region
        %s411 = sand.u32 1, 7
        %s412 = ssub.s32 1, %s411
        %s413 = scalar_lea.vmem %s383, %s412
        %s414 = ssub.s32 1, %s411
        %s415 = scalar_lea.vmem %s384, %s414 [#allocation2]
        %s416 = sshll.u32 1, %s411
        %s417 = ssub.s32 %s416, 1
        loop: start=0, step=1, limit=1
        $region247: #{tpu_custom_call.1} parent=245 // loop_pre_header
          _
        $region248: #{tpu_custom_call.1} parent=245 // loop_header
          %s419 = sphi 0, %s423
          %p420 = scmp.ge.s32.totalorder %s419, 1
          %s424 = sphi %s413, %s413
          %s425 = sphi %s415, %s415
        $region249: #{tpu_custom_call.1} parent=245 // loop_header_branch
          %422 = sbr.rel (%p420) target = $region253
        $region250: #{tpu_custom_call.1} parent=245 // loop_body
          %v426 = vld [vmem:[%s424] sm:%s417]
          %427 = vst [vmem:[%s425] sm:%s417] %v426
        $region251: #{tpu_custom_call.1} parent=245 // loop_footer
          %s423 = sadd.s32 1, %s419
        $region252: #{tpu_custom_call.1} parent=245 // loop_footer_branch
          %418 = sbr.rel target = $region248
        $region253: #{tpu_custom_call.1} parent=245 // loop_exit
          _
      $region246: #{tpu_custom_call.1} parent=230 // pred_fallthru
        _
    $region231: #{tpu_custom_call.1} parent=1 // pred_fallthru
      _
    // Predicated region
    $region232: #{tpu_custom_call.1} parent=1 // pred_check
      %p391 = pneg %p387
    $region233: #{tpu_custom_call.1} parent=1 // pred_check_branch
      %393 = sbr.rel (%p391) target = $region235
    $region234: #{tpu_custom_call.1} parent=1 // pred_region
      %s394 = sshll.u32 1, 1
      %s395 = ssub.s32 %s394, 1
      loop: start=0, step=1, limit=1
      $region236: #{tpu_custom_call.1} parent=234 // loop_pre_header
        _
      $region237: #{tpu_custom_call.1} parent=234 // loop_header
        %s397 = sphi 0, %s401
        %p398 = scmp.ge.s32.totalorder %s397, 1
        %s402 = sphi %s383, %s383
        %s403 = sphi %s384, %s384
      $region238: #{tpu_custom_call.1} parent=234 // loop_header_branch
        %400 = sbr.rel (%p398) target = $region242
      $region239: #{tpu_custom_call.1} parent=234 // loop_body
        %v404 = vld [vmem:[%s402] sm:%s395]
        %405 = vst [vmem:[%s403] sm:%s395] %v404
      $region240: #{tpu_custom_call.1} parent=234 // loop_footer
        %s401 = sadd.s32 1, %s397
      $region241: #{tpu_custom_call.1} parent=234 // loop_footer_branch
        %396 = sbr.rel target = $region237
      $region242: #{tpu_custom_call.1} parent=234 // loop_exit
        _
    $region235: #{tpu_custom_call.1} parent=1 // pred_fallthru
      _
    // Predicated region
    $region254: #{tpu_custom_call.1} parent=1 // pred_check
      _
    $region255: #{tpu_custom_call.1} parent=1 // pred_check_branch
      %430 = sbr.rel (0) target = $region257
    $region256: #{tpu_custom_call.1} parent=1 // pred_region
      %431 = vsyncadd %s385, 16
    $region257: #{tpu_custom_call.1} parent=1 // pred_fallthru
      _
    %s432 = smul.u32 1, 1
    %s433 = sshll.u32 %s432, 4
    %434 = dma.done [#allocation3], %s433
    %s435 = sshll.u32 %s432, 4
    %436 = dma.done %s79, %s435
    %s437 = sshll.u32 %s432, 4
    %438 = dma.done %s130, %s437
    %s439 = sshll.u32 %s432, 4
    %440 = dma.done %s181, %s439
    %s441 = sshll.u32 %s432, 4
    %442 = dma.done %s232, %s441
    %s443 = sshll.u32 %s432, 4
    %444 = dma.done %s283, %s443
    %s445 = sshll.u32 %s432, 4
    %446 = dma.done %s334, %s445
    %s447 = sshll.u32 %s432, 4
    %448 = dma.done %s385, %s447
    %v449 = vld [vmem:[#allocation2] sm:$0xff]
    %v450 = vld [vmem:[%s2] sm:$0xff]
    %v451 = vld [vmem:[%s2 + $0x8] sm:$0xff]
    %v452 = vld [vmem:[%s2 + $0x10] sm:$0xff]
    %v453 = vld [vmem:[%s2 + $0x18] sm:$0xff]
    %v454 = vld [vmem:[%s3] sm:$0x1]
    %v456 = vlaneseq
    %v457 = vshrl.u32 %v456, 7
    %v458 = vsub.s32 0, %v457
    %v459 = vrot.slane %v454, %v458
    %vm461 = vcmask 261120
    %v463 = vsel %vm461, %v449, 0
    %465 = vmatprep.subr.mxu0 0.0
    %466 = vmatpush1.msra.mxu0 0.0
    %467 = vmatprep.subr.mxu0 0.0
    %468 = vmatpush1.msra.mxu0 0.0
    %469 = vmatprep.subr.mxu0 0.0
    %470 = vmatpush1.msra.mxu0 0.0
    %471 = vmatprep.subr.mxu0 0.0
    %472 = vmatpush1.msra.mxu0 0.0
    %473 = vmatprep.subr.mxu0 0.0
    %474 = vmatpush1.msra.mxu0 0.0
    %475 = vmatprep.subr.mxu0 0.0
    %476 = vmatpush1.msra.mxu0 0.0
    %477 = vmatprep.subr.mxu0 0.0
    %478 = vmatpush1.msra.mxu0 0.0
    %479 = vmatprep.subr.mxu0 0.0
    %480 = vmatpush1.msra.mxu0 0.0
    %481 = vmatprep.subr.mxu0 0.0
    %482 = vmatpush1.msra.mxu0 0.0
    %483 = vmatprep.subr.mxu0 0.0
    %484 = vmatpush1.msra.mxu0 0.0
    %485 = vmatprep.subr.mxu0 0.0
    %486 = vmatpush1.msra.mxu0 0.0
    %487 = vmatprep.subr.mxu0 0.0
    %488 = vmatpush1.msra.mxu0 0.0
    %489 = vmatprep.subr.mxu0 0.0
    %490 = vmatpush1.msra.mxu0 %v453
    %491 = vmatprep.subr.mxu0 0.0
    %492 = vmatpush1.msra.mxu0 %v452
    %493 = vmatprep.subr.mxu0 0.0
    %494 = vmatpush1.msra.mxu0 %v451
    %495 = vmatprep.subr.mxu0 0.0
    %496 = vmatpush1.msra.mxu0 %v450
    %497 = vmatprep.subr.mxu0 0.0
    %498 = vmatpush2.msra.mxu0 0.0
    %499 = vmatprep.subr.mxu0 0.0
    %500 = vmatpush2.msra.mxu0 0.0
    %501 = vmatprep.subr.mxu0 0.0
    %502 = vmatpush2.msra.mxu0 0.0
    %503 = vmatprep.subr.mxu0 0.0
    %504 = vmatpush2.msra.mxu0 0.0
    %505 = vmatprep.subr.mxu0 0.0
    %506 = vmatpush2.msra.mxu0 0.0
    %507 = vmatprep.subr.mxu0 0.0
    %508 = vmatpush2.msra.mxu0 0.0
    %509 = vmatprep.subr.mxu0 0.0
    %510 = vmatpush2.msra.mxu0 0.0
    %511 = vmatprep.subr.mxu0 0.0
    %512 = vmatpush2.msra.mxu0 0.0
    %513 = vmatprep.subr.mxu0 0.0
    %514 = vmatpush2.msra.mxu0 0.0
    %515 = vmatprep.subr.mxu0 0.0
    %516 = vmatpush2.msra.mxu0 0.0
    %517 = vmatprep.subr.mxu0 0.0
    %518 = vmatpush2.msra.mxu0 0.0
    %519 = vmatprep.subr.mxu0 0.0
    %520 = vmatpush2.msra.mxu0 0.0
    %521 = vmatprep.subr.mxu0 0.0
    %522 = vmatpush2.msra.mxu0 0.0
    %523 = vmatprep.subr.mxu0 0.0
    %524 = vmatpush2.msra.mxu0 0.0
    %525 = vmatprep.subr.mxu0 0.0
    %526 = vmatpush2.msra.mxu0 0.0
    %527 = vmatprep.subr.mxu0 0.0
    %528 = vmatpush2.msra.mxu0 0.0
    %529 = vmatprep.mubr.f32.mxu0 0.0
    %530 = vmatmul.mubr.f32.gmra.mxu0 %v463
    %v531 = vpop.f32.mrf.mxu0
    %v532 = vadd.f32 %v459, %v531
    %v533 = vpop.f32.mrf.mxu0
    %534 = vdwg.mxu0
    %v535 = vxor.u32 %v532, 2147483648
    %v536 = vmul.f32 %v535, 1.442695
    %v537 = vpow.pop %v536
    %v538 = vadd.f32 %v537, 1.0
    %v539 = vrcp.pop %v538
    %v540 = vmul.f32 1.0, %v539
    %v541 = vmul.f32 %v532, %v540
    %v542 = vld [vmem:[%s4] sm:$0xff]
    %v543 = vld [vmem:[%s4 + $0x8] sm:$0xff]
    %v544 = vld [vmem:[%s4 + $0x10] sm:$0xff]
    %v545 = vld [vmem:[%s4 + $0x18] sm:$0xff]
    %v546 = vld [vmem:[%s4 + $0x20] sm:$0xff]
    %v547 = vld [vmem:[%s4 + $0x28] sm:$0xff]
    %v548 = vld [vmem:[%s4 + $0x30] sm:$0xff]
    %v549 = vld [vmem:[%s4 + $0x38] sm:$0xff]
    %v550 = vld [vmem:[%s4 + $0x40] sm:$0xff]
    %v551 = vld [vmem:[%s4 + $0x48] sm:$0xff]
    %v552 = vld [vmem:[%s4 + $0x50] sm:$0xff]
    %v553 = vld [vmem:[%s4 + $0x58] sm:$0xff]
    %v554 = vld [vmem:[%s4 + $0x60] sm:$0xff]
    %v555 = vld [vmem:[%s4 + $0x68] sm:$0xff]
    %v556 = vld [vmem:[%s4 + $0x70] sm:$0xff]
    %v557 = vld [vmem:[%s4 + $0x78] sm:$0xff]
    %v558 = vld [vmem:[%s5] sm:$0x1]
    %v560 = vlaneseq
    %v561 = vshrl.u32 %v560, 7
    %v562 = vsub.s32 0, %v561
    %v563 = vrot.slane %v558, %v562
    %565 = vmatprep.subr.mxu0 0.0
    %566 = vmatpush1.msra.mxu0 %v557
    %567 = vmatprep.subr.mxu0 0.0
    %568 = vmatpush1.msra.mxu0 %v556
    %569 = vmatprep.subr.mxu0 0.0
    %570 = vmatpush1.msra.mxu0 %v555
    %571 = vmatprep.subr.mxu0 0.0
    %572 = vmatpush1.msra.mxu0 %v554
    %573 = vmatprep.subr.mxu0 0.0
    %574 = vmatpush1.msra.mxu0 %v553
    %575 = vmatprep.subr.mxu0 0.0
    %576 = vmatpush1.msra.mxu0 %v552
    %577 = vmatprep.subr.mxu0 0.0
    %578 = vmatpush1.msra.mxu0 %v551
    %579 = vmatprep.subr.mxu0 0.0
    %580 = vmatpush1.msra.mxu0 %v550
    %581 = vmatprep.subr.mxu0 0.0
    %582 = vmatpush1.msra.mxu0 %v549
    %583 = vmatprep.subr.mxu0 0.0
    %584 = vmatpush1.msra.mxu0 %v548
    %585 = vmatprep.subr.mxu0 0.0
    %586 = vmatpush1.msra.mxu0 %v547
    %587 = vmatprep.subr.mxu0 0.0
    %588 = vmatpush1.msra.mxu0 %v546
    %589 = vmatprep.subr.mxu0 0.0
    %590 = vmatpush1.msra.mxu0 %v545
    %591 = vmatprep.subr.mxu0 0.0
    %592 = vmatpush1.msra.mxu0 %v544
    %593 = vmatprep.subr.mxu0 0.0
    %594 = vmatpush1.msra.mxu0 %v543
    %595 = vmatprep.subr.mxu0 0.0
    %596 = vmatpush1.msra.mxu0 %v542
    %597 = vmatprep.subr.mxu0 0.0
    %598 = vmatpush2.msra.mxu0 0.0
    %599 = vmatprep.subr.mxu0 0.0
    %600 = vmatpush2.msra.mxu0 0.0
    %601 = vmatprep.subr.mxu0 0.0
    %602 = vmatpush2.msra.mxu0 0.0
    %603 = vmatprep.subr.mxu0 0.0
    %604 = vmatpush2.msra.mxu0 0.0
    %605 = vmatprep.subr.mxu0 0.0
    %606 = vmatpush2.msra.mxu0 0.0
    %607 = vmatprep.subr.mxu0 0.0
    %608 = vmatpush2.msra.mxu0 0.0
    %609 = vmatprep.subr.mxu0 0.0
    %610 = vmatpush2.msra.mxu0 0.0
    %611 = vmatprep.subr.mxu0 0.0
    %612 = vmatpush2.msra.mxu0 0.0
    %613 = vmatprep.subr.mxu0 0.0
    %614 = vmatpush2.msra.mxu0 0.0
    %615 = vmatprep.subr.mxu0 0.0
    %616 = vmatpush2.msra.mxu0 0.0
    %617 = vmatprep.subr.mxu0 0.0
    %618 = vmatpush2.msra.mxu0 0.0
    %619 = vmatprep.subr.mxu0 0.0
    %620 = vmatpush2.msra.mxu0 0.0
    %621 = vmatprep.subr.mxu0 0.0
    %622 = vmatpush2.msra.mxu0 0.0
    %623 = vmatprep.subr.mxu0 0.0
    %624 = vmatpush2.msra.mxu0 0.0
    %625 = vmatprep.subr.mxu0 0.0
    %626 = vmatpush2.msra.mxu0 0.0
    %627 = vmatprep.subr.mxu0 0.0
    %628 = vmatpush2.msra.mxu0 0.0
    %629 = vmatprep.mubr.f32.mxu0 0.0
    %630 = vmatmul.mubr.f32.gmra.mxu0 %v541
    %v631 = vpop.f32.mrf.mxu0
    %v632 = vadd.f32 %v563, %v631
    %v633 = vpop.f32.mrf.mxu0
    %634 = vdwg.mxu0
    %635 = vst [vmem:[#allocation6] sm:$0xff] %v632
    // Predicated region
    $region258: #{tpu_custom_call.1} parent=1 // pred_check
      _
    $region259: #{tpu_custom_call.1} parent=1 // pred_check_branch
      %637 = sbr.rel (0) target = $region261
    $region260: #{tpu_custom_call.1} parent=1 // pred_region
      %s639 = ssub.s32 128, 128
      %640 = vsyncadd [#allocation7], %s639
      %s642 = sshll.u32 [#allocation6], 4
      %s643 = int_to_ptr.vmem [resolvable:$true] %s642
      %645 = dma.vmem_to_hbm [thread:$0]  %s643, 128, %s6, [#allocation7]
    $region261: #{tpu_custom_call.1} parent=1 // pred_fallthru
      _
    // Predicated region
    $region262: #{tpu_custom_call.1} parent=1 // pred_check
      _
    $region263: #{tpu_custom_call.1} parent=1 // pred_check_branch
      %647 = sbr.rel (0) target = $region265
    $region264: #{tpu_custom_call.1} parent=1 // pred_region
      %648 = dma.done [#allocation7], 128
    $region265: #{tpu_custom_call.1} parent=1 // pred_fallthru
      _
    %649 = vsyncpa [#allocation7], 1
  %650 = vsyncmov [#allocation3]
  %s651 = vpop.sfrf %650
  %p652 = scmp.eq.s32.totalorder %s651, 0
  %p653 = pneg %p652
  %655 = shalt.err (%p653)
  %s656 = scalar_lea.sflag [#allocation3], 1
  %657 = vsyncmov %s656
  %s658 = vpop.sfrf %657
  %p659 = scmp.eq.s32.totalorder %s658, 0
  %p660 = pneg %p659
  %662 = shalt.err (%p660)
  %s663 = scalar_lea.sflag [#allocation3], 2
  %664 = vsyncmov %s663
  %s665 = vpop.sfrf %664
  %p666 = scmp.eq.s32.totalorder %s665, 0
  %p667 = pneg %p666
  %669 = shalt.err (%p667)
  %s670 = scalar_lea.sflag [#allocation3], 3
  %671 = vsyncmov %s670
  %s672 = vpop.sfrf %671
  %p673 = scmp.eq.s32.totalorder %s672, 0
  %p674 = pneg %p673
  %676 = shalt.err (%p674)
  %s677 = scalar_lea.sflag [#allocation3], 4
  %678 = vsyncmov %s677
  %s679 = vpop.sfrf %678
  %p680 = scmp.eq.s32.totalorder %s679, 0
  %p681 = pneg %p680
  %683 = shalt.err (%p681)
  %s684 = scalar_lea.sflag [#allocation3], 5
  %685 = vsyncmov %s684
  %s686 = vpop.sfrf %685
  %p687 = scmp.eq.s32.totalorder %s686, 0
  %p688 = pneg %p687
  %690 = shalt.err (%p688)
  %s691 = scalar_lea.sflag [#allocation3], 6
  %692 = vsyncmov %s691
  %s693 = vpop.sfrf %692
  %p694 = scmp.eq.s32.totalorder %s693, 0
  %p695 = pneg %p694
  %697 = shalt.err (%p695)
  %s698 = scalar_lea.sflag [#allocation3], 7
  %699 = vsyncmov %s698
  %s700 = vpop.sfrf %699
  %p701 = scmp.eq.s32.totalorder %s700, 0
  %p702 = pneg %p701
  %704 = shalt.err (%p702)

</llo_original>
